<compile_context>
chip_gen: v6e
topology: v6e:2x2x1
jax: 0.10.0
libtpu: 0.0.40
codegen_flags: <defaults>
</compile_context>

<pallas_src>
import jax
import jax.numpy as jnp
from jax.experimental import pallas as pl
from jax.experimental.pallas import tpu as pltpu


# ----------------------------------------------------------------------------
# Kernels
# ----------------------------------------------------------------------------

def _linear_mix_kernel(x_ref, w_ref, b_ref, alpha_ref, o_ref):
    """Fused Linear + MIX activation for one batch tile.

    h = x @ w + b                                     (MXU)
    a = softmax(alpha, axis=0)   per-neuron mixing weights over 4 base acts
    y = a0*relu(h) + a1*sigmoid(h) + a2*tanh(h) + a3*h
    """
    h = jnp.dot(x_ref[...], w_ref[...], preferred_element_type=jnp.float32)
    h = h + b_ref[...]

    # Softmax-normalized per-neuron mixing coefficients, shape (4, d_out).
    a = alpha_ref[...]
    a = a - jnp.max(a, axis=0, keepdims=True)
    e = jnp.exp(a)
    a = e / jnp.sum(e, axis=0, keepdims=True)

    sig = 1.0 / (1.0 + jnp.exp(-h))           # EUP exp; keeps VALU free
    y = (a[0:1, :] * jnp.maximum(h, 0.0)
         + a[1:2, :] * sig
         + a[2:3, :] * jnp.tanh(h)
         + a[3:4, :] * h)
    o_ref[...] = y.astype(o_ref.dtype)


def _linear_logsoftmax_kernel(x_ref, w_ref, b_ref, o_ref):
    """Fused final Linear + LogSoftmax(dim=1) for one batch tile."""
    logits = jnp.dot(x_ref[...], w_ref[...], preferred_element_type=jnp.float32)
    logits = logits + b_ref[...]
    m = jnp.max(logits, axis=-1, keepdims=True)
    shifted = logits - m
    lse = jnp.log(jnp.sum(jnp.exp(shifted), axis=-1, keepdims=True))
    o_ref[...] = (shifted - lse).astype(o_ref.dtype)


# ----------------------------------------------------------------------------
# pallas_call wrappers
# ----------------------------------------------------------------------------

_BLOCK_B = 512  # batch tile: multiple of 8; ~1.6 MiB activations at d_in=784


def linear_mix(x, w, b, alpha, *, block_b=_BLOCK_B):
    batch, d_in = x.shape
    d_out = w.shape[1]
    bb = min(batch, block_b)
    grid = (pl.cdiv(batch, bb),)
    itemsize = jnp.dtype(x.dtype).itemsize
    cost = pl.CostEstimate(
        flops=2 * batch * d_in * d_out,
        transcendentals=3 * batch * d_out,
        bytes_accessed=itemsize * (batch * d_in + d_in * d_out
                                   + 5 * d_out + batch * d_out),
    )
    return pl.pallas_call(
        _linear_mix_kernel,
        out_shape=jax.ShapeDtypeStruct((batch, d_out), x.dtype),
        grid_spec=pltpu.PrefetchScalarGridSpec(
            num_scalar_prefetch=0,
            grid=grid,
            in_specs=[
                pl.BlockSpec((bb, d_in), lambda i: (i, 0)),     # batch tile
                pl.BlockSpec((d_in, d_out), lambda i: (0, 0)),  # resident W
                pl.BlockSpec((1, d_out), lambda i: (0, 0)),     # resident b
                pl.BlockSpec((4, d_out), lambda i: (0, 0)),     # resident alpha
            ],
            out_specs=pl.BlockSpec((bb, d_out), lambda i: (i, 0)),
        ),
        compiler_params=pltpu.CompilerParams(
            dimension_semantics=("parallel",),
        ),
        cost_estimate=cost,
    )(x, w, b, alpha)


def linear_logsoftmax(x, w, b, *, block_b=_BLOCK_B):
    batch, d_in = x.shape
    d_out = w.shape[1]
    bb = min(batch, block_b)
    grid = (pl.cdiv(batch, bb),)
    itemsize = jnp.dtype(x.dtype).itemsize
    cost = pl.CostEstimate(
        flops=2 * batch * d_in * d_out,
        transcendentals=2 * batch * d_out,
        bytes_accessed=itemsize * (batch * d_in + d_in * d_out
                                   + d_out + batch * d_out),
    )
    return pl.pallas_call(
        _linear_logsoftmax_kernel,
        out_shape=jax.ShapeDtypeStruct((batch, d_out), x.dtype),
        grid_spec=pltpu.PrefetchScalarGridSpec(
            num_scalar_prefetch=0,
            grid=grid,
            in_specs=[
                pl.BlockSpec((bb, d_in), lambda i: (i, 0)),
                pl.BlockSpec((d_in, d_out), lambda i: (0, 0)),
                pl.BlockSpec((1, d_out), lambda i: (0, 0)),
            ],
            out_specs=pl.BlockSpec((bb, d_out), lambda i: (i, 0)),
        ),
        compiler_params=pltpu.CompilerParams(
            dimension_semantics=("parallel",),
        ),
        cost_estimate=cost,
    )(x, w, b)


# ----------------------------------------------------------------------------
# Network_jit equivalent
# ----------------------------------------------------------------------------

def _init_linear(key, d_in, d_out, dtype=jnp.float32):
    kw, kb = jax.random.split(key)
    bound = 1.0 / (d_in ** 0.5)
    w = jax.random.uniform(kw, (d_in, d_out), dtype, -bound, bound)
    b = jax.random.uniform(kb, (1, d_out), dtype, -bound, bound)
    return w, b


class NetworkJitPallas:
    """Pallas port of Network_jit (network=1, MNIST, LogSoftmax head)."""

    N_BASE_ACTS = 4  # relu, sigmoid, tanh, identity

    def __init__(self, key, network=1, nn_layers=3, dataset="MNIST"):
        out_neurons = 784 if dataset == "MNIST" else 3072
        n_classes = 10 if dataset in ("MNIST", "CIFAR10") else None
        self.hidden = []  # list of (w, b, alpha)
        for layer in range(nn_layers):
            if network == 1:
                in_neurons = out_neurons
                out_neurons = in_neurons // 2
            elif network == 2:
                in_neurons = out_neurons
                out_neurons = 300
            key, klin = jax.random.split(key)
            if layer == nn_layers - 1:
                self.w_out, self.b_out = _init_linear(klin, in_neurons, n_classes)
            else:
                w, b = _init_linear(klin, in_neurons, out_neurons)
                key, kmix = jax.random.split(key)
                alpha = 0.1 * jax.random.normal(
                    kmix, (self.N_BASE_ACTS, out_neurons), jnp.float32)
                self.hidden.append((w, b, alpha))

    def __call__(self, s):
        l_out = s
        for (w, b, alpha) in self.hidden:
            l_out = linear_mix(l_out, w, b, alpha)
        out = linear_logsoftmax(l_out, self.w_out, self.b_out)
        return (out, None, None, None)


# ----------------------------------------------------------------------------
# Pure-JAX reference (for correctness check only)
# ----------------------------------------------------------------------------

def _reference_forward(net, s):
    hp = jax.lax.Precision.HIGHEST
    l_out = s
    for (w, b, alpha) in net.hidden:
        h = jnp.dot(l_out, w, precision=hp) + b
        a = jax.nn.softmax(alpha, axis=0)
        l_out = (a[0:1] * jnp.maximum(h, 0.0)
                 + a[1:2] * jax.nn.sigmoid(h)
                 + a[2:3] * jnp.tanh(h)
                 + a[3:4] * h)
    logits = jnp.dot(l_out, net.w_out, precision=hp) + net.b_out
    return jax.nn.log_softmax(logits, axis=1)


if __name__ == "__main__":
    key = jax.random.PRNGKey(0)
    key, kx, knet = jax.random.split(key, 3)

    batch = 8                      # small, sublane-aligned batch
    in_features = 784              # flattened MNIST input
    x = jax.random.normal(kx, (batch, in_features), dtype=jnp.float32)

    net = NetworkJitPallas(knet, network=1, nn_layers=3, dataset="MNIST")

    out, aux1, aux2, aux3 = net(x)
    jax.block_until_ready(out)

    assert out.shape == (batch, 10)
    assert out.dtype == jnp.float32
    assert aux1 is None and aux2 is None and aux3 is None

    # Log-softmax rows must exp-sum to 1.
    row_sums = jnp.sum(jnp.exp(out), axis=1)
    assert bool(jnp.all(jnp.abs(row_sums - 1.0) < 1e-4))

    # Match the pure-JAX reference forward.
    ref = _reference_forward(net, x)
    assert bool(jnp.allclose(out, ref, atol=5e-3, rtol=5e-3))

    print("KERNEL_OK")
</pallas_src>

<mosaic_0001>
module attributes {stable_mosaic.version = 11 : i64} {
  func.func @_linear_mix_kernel(%arg0: i32, %arg1: memref<8x784xf32, #tpu.memory_space<vmem>>, %arg2: memref<784x392xf32, #tpu.memory_space<vmem>>, %arg3: memref<1x392xf32, #tpu.memory_space<vmem>>, %arg4: memref<4x392xf32, #tpu.memory_space<vmem>>, %arg5: memref<8x392xf32, #tpu.memory_space<vmem>>) attributes {dimension_semantics = [#tpu.dimension_semantics<parallel>], iteration_bounds = array<i64: 1>, scalar_prefetch = 0 : i64, scratch_operands = 0 : i64, tpu.core_type = #tpu.core_type<tc>, window_params = [{transform_indices = @transform_0, window_bounds = array<i64: 8, 784>}, {pipeline_mode = #tpu.pipeline_mode<synchronous>, transform_indices = @transform_1, window_bounds = array<i64: 784, 392>}, {pipeline_mode = #tpu.pipeline_mode<synchronous>, transform_indices = @transform_2, window_bounds = array<i64: 1, 392>}, {pipeline_mode = #tpu.pipeline_mode<synchronous>, transform_indices = @transform_3, window_bounds = array<i64: 4, 392>}, {transform_indices = @transform_4, window_bounds = array<i64: 8, 392>}]} {
    %c0 = arith.constant 0 : index
    %c0_0 = arith.constant 0 : index
    %0 = vector.load %arg1[%c0, %c0_0] : memref<8x784xf32, #tpu.memory_space<vmem>>, vector<8x784xf32>
    %c0_1 = arith.constant 0 : index
    %c0_2 = arith.constant 0 : index
    %1 = vector.load %arg2[%c0_1, %c0_2] : memref<784x392xf32, #tpu.memory_space<vmem>>, vector<784x392xf32>
    %cst = arith.constant dense<0.000000e+00> : vector<8x392xf32>
    %2 = tpu.matmul %0, %1, %cst {dimension_numbers = #tpu.dot_dimension_numbers<[1], [0], [0], [1], [0, 0, 1, 1], [], []>} : vector<8x784xf32>, vector<784x392xf32>, vector<8x392xf32> -> vector<8x392xf32>
    %c0_3 = arith.constant 0 : index
    %c0_4 = arith.constant 0 : index
    %3 = vector.load %arg3[%c0_3, %c0_4] : memref<1x392xf32, #tpu.memory_space<vmem>>, vector<1x392xf32>
    %4 = vector.broadcast %3 : vector<1x392xf32> to vector<8x392xf32>
    %5 = arith.addf %2, %4 : vector<8x392xf32>
    %c0_5 = arith.constant 0 : index
    %c0_6 = arith.constant 0 : index
    %6 = vector.load %arg4[%c0_5, %c0_6] : memref<4x392xf32, #tpu.memory_space<vmem>>, vector<4x392xf32>
    %cst_7 = arith.constant dense<0xFF800000> : vector<392xf32>
    %7 = vector.multi_reduction <maximumf>, %6, %cst_7 [0] : vector<4x392xf32> to vector<392xf32>
    %8 = vector.shape_cast %7 : vector<392xf32> to vector<1x392xf32>
    %9 = vector.broadcast %8 : vector<1x392xf32> to vector<4x392xf32>
    %10 = arith.subf %6, %9 : vector<4x392xf32>
    %11 = math.exp %10 : vector<4x392xf32>
    %cst_8 = arith.constant dense<0.000000e+00> : vector<392xf32>
    %12 = vector.multi_reduction <add>, %11, %cst_8 [0] : vector<4x392xf32> to vector<392xf32>
    %13 = vector.shape_cast %12 : vector<392xf32> to vector<1x392xf32>
    %14 = vector.broadcast %13 : vector<1x392xf32> to vector<4x392xf32>
    %15 = arith.divf %11, %14 : vector<4x392xf32>
    %cst_9 = arith.constant 0.000000e+00 : f32
    %16 = vector.broadcast %cst_9 : f32 to vector<8x392xf32>
    %17 = arith.subf %16, %5 : vector<8x392xf32>
    %18 = math.exp %17 : vector<8x392xf32>
    %cst_10 = arith.constant 1.000000e+00 : f32
    %19 = vector.broadcast %cst_10 : f32 to vector<8x392xf32>
    %20 = arith.addf %19, %18 : vector<8x392xf32>
    %cst_11 = arith.constant 1.000000e+00 : f32
    %21 = vector.broadcast %cst_11 : f32 to vector<8x392xf32>
    %22 = arith.divf %21, %20 : vector<8x392xf32>
    %23 = vector.extract_strided_slice %15 {offsets = [0, 0], sizes = [1, 392], strides = [1, 1]} : vector<4x392xf32> to vector<1x392xf32>
    %cst_12 = arith.constant 0.000000e+00 : f32
    %24 = vector.broadcast %cst_12 : f32 to vector<8x392xf32>
    %25 = arith.maximumf %5, %24 : vector<8x392xf32>
    %26 = vector.broadcast %23 : vector<1x392xf32> to vector<8x392xf32>
    %27 = arith.mulf %26, %25 : vector<8x392xf32>
    %28 = vector.extract_strided_slice %15 {offsets = [1, 0], sizes = [1, 392], strides = [1, 1]} : vector<4x392xf32> to vector<1x392xf32>
    %29 = vector.broadcast %28 : vector<1x392xf32> to vector<8x392xf32>
    %30 = arith.mulf %29, %22 : vector<8x392xf32>
    %31 = arith.addf %27, %30 : vector<8x392xf32>
    %32 = vector.extract_strided_slice %15 {offsets = [2, 0], sizes = [1, 392], strides = [1, 1]} : vector<4x392xf32> to vector<1x392xf32>
    %33 = math.tanh %5 : vector<8x392xf32>
    %34 = vector.broadcast %32 : vector<1x392xf32> to vector<8x392xf32>
    %35 = arith.mulf %34, %33 : vector<8x392xf32>
    %36 = arith.addf %31, %35 : vector<8x392xf32>
    %37 = vector.extract_strided_slice %15 {offsets = [3, 0], sizes = [1, 392], strides = [1, 1]} : vector<4x392xf32> to vector<1x392xf32>
    %38 = vector.broadcast %37 : vector<1x392xf32> to vector<8x392xf32>
    %39 = arith.mulf %38, %5 : vector<8x392xf32>
    %40 = arith.addf %36, %39 : vector<8x392xf32>
    %c0_13 = arith.constant 0 : index
    %c0_14 = arith.constant 0 : index
    %41 = vector.load %arg5[%c0_13, %c0_14] : memref<8x392xf32, #tpu.memory_space<vmem>>, vector<8x392xf32>
    tpu.vector_store %arg5[%c0_13, %c0_14], %40 {strides = array<i32>} : memref<8x392xf32, #tpu.memory_space<vmem>>, vector<8x392xf32>,
    return
  }
  func.func @transform_0(%arg0: i32) -> (i32, i32) {
    %c0_i32 = arith.constant 0 : i32
    %c0_i32_0 = arith.constant 0 : i32
    return %arg0, %c0_i32 : i32, i32
  }
  func.func @transform_1(%arg0: i32) -> (i32, i32) {
    %c0_i32 = arith.constant 0 : i32
    %c0_i32_0 = arith.constant 0 : i32
    %c0_i32_1 = arith.constant 0 : i32
    return %c0_i32, %c0_i32_0 : i32, i32
  }
  func.func @transform_2(%arg0: i32) -> (i32, i32) {
    %c0_i32 = arith.constant 0 : i32
    %c0_i32_0 = arith.constant 0 : i32
    %c0_i32_1 = arith.constant 0 : i32
    return %c0_i32, %c0_i32_0 : i32, i32
  }
  func.func @transform_3(%arg0: i32) -> (i32, i32) {
    %c0_i32 = arith.constant 0 : i32
    %c0_i32_0 = arith.constant 0 : i32
    %c0_i32_1 = arith.constant 0 : i32
    return %c0_i32, %c0_i32_0 : i32, i32
  }
  func.func @transform_4(%arg0: i32) -> (i32, i32) {
    %c0_i32 = arith.constant 0 : i32
    %c0_i32_0 = arith.constant 0 : i32
    return %arg0, %c0_i32 : i32, i32
  }
}

</mosaic_0001>

<llo_original>
// kernel: tpu_custom_call.1
$region0: #{tpu_custom_call.1}
  #allocation0 [shape = 'u32[]', space=smem, size = 0x4, offset = 0x4, fixed_abs, tag = 'smem constant byte address 0x4 - core index']
  #allocation1 [shape = 'u32[144,128]{1,0:T(1,128)}', space=vmem, size = 0x12000, scoped, tag = 'internal scratch']
  %s0 = inlined_call_operand.vmem [shape: f32[8,784], index: 0, kind: input, shape index: {}]
  %s1 = inlined_call_operand.vmem [shape: f32[784,392], index: 1, kind: input, shape index: {}]
  %s2 = inlined_call_operand.vmem [shape: f32[1,392], index: 2, kind: input, shape index: {}]
  %s3 = inlined_call_operand.vmem [shape: f32[4,392], index: 3, kind: input, shape index: {}]
  %s4 = inlined_call_operand.hbm [shape: f32[8,392], index: 4, kind: output, shape index: {}]
  %s5 = sld [smem:[#allocation0]]
  $region26: #{tpu_custom_call.1} parent=0
    _
  %s7 = ssub.s32 1, %s5
  %s8 = scalar_select 0, %s7, %s5
  $region1: #{tpu_custom_call.1} parent=0
    #allocation2 [shape = 'u8[16384]{0}', space=vmem, size = 0x4000, scoped, tag = 'output window, operand 0, single buffered']
    #allocation3 [shape = 's32[1]{0}', space=sflag, size = 0x4, scoped, tag = 'scoped memory for tpu_custom_call.1']
    %9 = vsyncpa [#allocation3], 0
    // Predicated region
    $region2: #{tpu_custom_call.1} parent=1 // pred_check
      _
    $region3: #{tpu_custom_call.1} parent=1 // pred_check_branch
      %11 = sbr.rel (0) target = $region5
    $region4: #{tpu_custom_call.1} parent=1 // pred_region
      _
    $region5: #{tpu_custom_call.1} parent=1 // pred_fallthru
      _
    // Predicated region
    $region6: #{tpu_custom_call.1} parent=1 // pred_check
      _
    $region7: #{tpu_custom_call.1} parent=1 // pred_check_branch
      %13 = sbr.rel (0) target = $region9
    $region8: #{tpu_custom_call.1} parent=1 // pred_region
      _
    $region9: #{tpu_custom_call.1} parent=1 // pred_fallthru
      _
    // Predicated region
    $region10: #{tpu_custom_call.1} parent=1 // pred_check
      _
    $region11: #{tpu_custom_call.1} parent=1 // pred_check_branch
      %15 = sbr.rel (0) target = $region13
    $region12: #{tpu_custom_call.1} parent=1 // pred_region
      _
    $region13: #{tpu_custom_call.1} parent=1 // pred_fallthru
      _
    // Predicated region
    $region14: #{tpu_custom_call.1} parent=1 // pred_check
      _
    $region15: #{tpu_custom_call.1} parent=1 // pred_check_branch
      %17 = sbr.rel (0) target = $region17
    $region16: #{tpu_custom_call.1} parent=1 // pred_region
      _
    $region17: #{tpu_custom_call.1} parent=1 // pred_fallthru
      _
    %v18 = vld [vmem:[%s0] sm:$0xff]
    %v19 = vld [vmem:[%s0 + $0x8] sm:$0xff]
    %v20 = vld [vmem:[%s0 + $0x10] sm:$0xff]
    %v21 = vld [vmem:[%s0 + $0x18] sm:$0xff]
    %v22 = vld [vmem:[%s0 + $0x20] sm:$0xff]
    %v23 = vld [vmem:[%s0 + $0x28] sm:$0xff]
    %v24 = vld [vmem:[%s0 + $0x30] sm:$0xff]
    %v25 = vld [vmem:[%s1] sm:$0xff]
    %v26 = vld [vmem:[%s1 + $0x8] sm:$0xff]
    %v27 = vld [vmem:[%s1 + $0x10] sm:$0xff]
    %v28 = vld [vmem:[%s1 + $0x18] sm:$0xff]
    %v29 = vld [vmem:[%s1 + $0x20] sm:$0xff]
    %v30 = vld [vmem:[%s1 + $0x28] sm:$0xff]
    %v31 = vld [vmem:[%s1 + $0x30] sm:$0xff]
    %v32 = vld [vmem:[%s1 + $0x38] sm:$0xff]
    %v33 = vld [vmem:[%s1 + $0x40] sm:$0xff]
    %v34 = vld [vmem:[%s1 + $0x48] sm:$0xff]
    %v35 = vld [vmem:[%s1 + $0x50] sm:$0xff]
    %v36 = vld [vmem:[%s1 + $0x58] sm:$0xff]
    %v37 = vld [vmem:[%s1 + $0x60] sm:$0xff]
    %v38 = vld [vmem:[%s1 + $0x68] sm:$0xff]
    %v39 = vld [vmem:[%s1 + $0x70] sm:$0xff]
    %v40 = vld [vmem:[%s1 + $0x78] sm:$0xff]
    %v41 = vld [vmem:[%s1 + $0x80] sm:$0xff]
    %v42 = vld [vmem:[%s1 + $0x88] sm:$0xff]
    %v43 = vld [vmem:[%s1 + $0x90] sm:$0xff]
    %v44 = vld [vmem:[%s1 + $0x98] sm:$0xff]
    %v45 = vld [vmem:[%s1 + $0xa0] sm:$0xff]
    %v46 = vld [vmem:[%s1 + $0xa8] sm:$0xff]
    %v47 = vld [vmem:[%s1 + $0xb0] sm:$0xff]
    %v48 = vld [vmem:[%s1 + $0xb8] sm:$0xff]
    %v49 = vld [vmem:[%s1 + $0xc0] sm:$0xff]
    %v50 = vld [vmem:[%s1 + $0xc8] sm:$0xff]
    %v51 = vld [vmem:[%s1 + $0xd0] sm:$0xff]
    %v52 = vld [vmem:[%s1 + $0xd8] sm:$0xff]
    %v53 = vld [vmem:[%s1 + $0xe0] sm:$0xff]
    %v54 = vld [vmem:[%s1 + $0xe8] sm:$0xff]
    %v55 = vld [vmem:[%s1 + $0xf0] sm:$0xff]
    %v56 = vld [vmem:[%s1 + $0xf8] sm:$0xff]
    %v57 = vld [vmem:[%s1 + $0x100] sm:$0xff]
    %v58 = vld [vmem:[%s1 + $0x108] sm:$0xff]
    %v59 = vld [vmem:[%s1 + $0x110] sm:$0xff]
    %v60 = vld [vmem:[%s1 + $0x118] sm:$0xff]
    %v61 = vld [vmem:[%s1 + $0x120] sm:$0xff]
    %v62 = vld [vmem:[%s1 + $0x128] sm:$0xff]
    %v63 = vld [vmem:[%s1 + $0x130] sm:$0xff]
    %v64 = vld [vmem:[%s1 + $0x138] sm:$0xff]
    %v65 = vld [vmem:[%s1 + $0x140] sm:$0xff]
    %v66 = vld [vmem:[%s1 + $0x148] sm:$0xff]
    %v67 = vld [vmem:[%s1 + $0x150] sm:$0xff]
    %v68 = vld [vmem:[%s1 + $0x158] sm:$0xff]
    %v69 = vld [vmem:[%s1 + $0x160] sm:$0xff]
    %v70 = vld [vmem:[%s1 + $0x168] sm:$0xff]
    %v71 = vld [vmem:[%s1 + $0x170] sm:$0xff]
    %v72 = vld [vmem:[%s1 + $0x178] sm:$0xff]
    %v73 = vld [vmem:[%s1 + $0x180] sm:$0xff]
    %v74 = vld [vmem:[%s1 + $0x188] sm:$0xff]
    %v75 = vld [vmem:[%s1 + $0x190] sm:$0xff]
    %v76 = vld [vmem:[%s1 + $0x198] sm:$0xff]
    %v77 = vld [vmem:[%s1 + $0x1a0] sm:$0xff]
    %v78 = vld [vmem:[%s1 + $0x1a8] sm:$0xff]
    %v79 = vld [vmem:[%s1 + $0x1b0] sm:$0xff]
    %v80 = vld [vmem:[%s1 + $0x1b8] sm:$0xff]
    %v81 = vld [vmem:[%s1 + $0x1c0] sm:$0xff]
    %v82 = vld [vmem:[%s1 + $0x1c8] sm:$0xff]
    %v83 = vld [vmem:[%s1 + $0x1d0] sm:$0xff]
    %v84 = vld [vmem:[%s1 + $0x1d8] sm:$0xff]
    %v85 = vld [vmem:[%s1 + $0x1e0] sm:$0xff]
    %v86 = vld [vmem:[%s1 + $0x1e8] sm:$0xff]
    %v87 = vld [vmem:[%s1 + $0x1f0] sm:$0xff]
    %v88 = vld [vmem:[%s1 + $0x1f8] sm:$0xff]
    %v89 = vld [vmem:[%s1 + $0x200] sm:$0xff]
    %v90 = vld [vmem:[%s1 + $0x208] sm:$0xff]
    %v91 = vld [vmem:[%s1 + $0x210] sm:$0xff]
    %v92 = vld [vmem:[%s1 + $0x218] sm:$0xff]
    %v93 = vld [vmem:[%s1 + $0x220] sm:$0xff]
    %v94 = vld [vmem:[%s1 + $0x228] sm:$0xff]
    %v95 = vld [vmem:[%s1 + $0x230] sm:$0xff]
    %v96 = vld [vmem:[%s1 + $0x238] sm:$0xff]
    %v97 = vld [vmem:[%s1 + $0x240] sm:$0xff]
    %v98 = vld [vmem:[%s1 + $0x248] sm:$0xff]
    %v99 = vld [vmem:[%s1 + $0x250] sm:$0xff]
    %v100 = vld [vmem:[%s1 + $0x258] sm:$0xff]
    %v101 = vld [vmem:[%s1 + $0x260] sm:$0xff]
    %v102 = vld [vmem:[%s1 + $0x268] sm:$0xff]
    %v103 = vld [vmem:[%s1 + $0x270] sm:$0xff]
    %v104 = vld [vmem:[%s1 + $0x278] sm:$0xff]
    %v105 = vld [vmem:[%s1 + $0x280] sm:$0xff]
    %v106 = vld [vmem:[%s1 + $0x288] sm:$0xff]
    %v107 = vld [vmem:[%s1 + $0x290] sm:$0xff]
    %v108 = vld [vmem:[%s1 + $0x298] sm:$0xff]
    %v109 = vld [vmem:[%s1 + $0x2a0] sm:$0xff]
    %v110 = vld [vmem:[%s1 + $0x2a8] sm:$0xff]
    %v111 = vld [vmem:[%s1 + $0x2b0] sm:$0xff]
    %v112 = vld [vmem:[%s1 + $0x2b8] sm:$0xff]
    %v113 = vld [vmem:[%s1 + $0x2c0] sm:$0xff]
    %v114 = vld [vmem:[%s1 + $0x2c8] sm:$0xff]
    %v115 = vld [vmem:[%s1 + $0x2d0] sm:$0xff]
    %v116 = vld [vmem:[%s1 + $0x2d8] sm:$0xff]
    %v117 = vld [vmem:[%s1 + $0x2e0] sm:$0xff]
    %v118 = vld [vmem:[%s1 + $0x2e8] sm:$0xff]
    %v119 = vld [vmem:[%s1 + $0x2f0] sm:$0xff]
    %v120 = vld [vmem:[%s1 + $0x2f8] sm:$0xff]
    %v121 = vld [vmem:[%s1 + $0x300] sm:$0xff]
    %v122 = vld [vmem:[%s1 + $0x308] sm:$0xff]
    %v123 = vld [vmem:[%s1 + $0x310] sm:$0xff]
    %v124 = vld [vmem:[%s1 + $0x318] sm:$0xff]
    %v125 = vld [vmem:[%s1 + $0x320] sm:$0xff]
    %v126 = vld [vmem:[%s1 + $0x328] sm:$0xff]
    %v127 = vld [vmem:[%s1 + $0x330] sm:$0xff]
    %v128 = vld [vmem:[%s1 + $0x338] sm:$0xff]
    %v129 = vld [vmem:[%s1 + $0x340] sm:$0xff]
    %v130 = vld [vmem:[%s1 + $0x348] sm:$0xff]
    %v131 = vld [vmem:[%s1 + $0x350] sm:$0xff]
    %v132 = vld [vmem:[%s1 + $0x358] sm:$0xff]
    %v133 = vld [vmem:[%s1 + $0x360] sm:$0xff]
    %v134 = vld [vmem:[%s1 + $0x368] sm:$0xff]
    %v135 = vld [vmem:[%s1 + $0x370] sm:$0xff]
    %v136 = vld [vmem:[%s1 + $0x378] sm:$0xff]
    %v137 = vld [vmem:[%s1 + $0x380] sm:$0xff]
    %v138 = vld [vmem:[%s1 + $0x388] sm:$0xff]
    %v139 = vld [vmem:[%s1 + $0x390] sm:$0xff]
    %v140 = vld [vmem:[%s1 + $0x398] sm:$0xff]
    %v141 = vld [vmem:[%s1 + $0x3a0] sm:$0xff]
    %v142 = vld [vmem:[%s1 + $0x3a8] sm:$0xff]
    %v143 = vld [vmem:[%s1 + $0x3b0] sm:$0xff]
    %v144 = vld [vmem:[%s1 + $0x3b8] sm:$0xff]
    %v145 = vld [vmem:[%s1 + $0x3c0] sm:$0xff]
    %v146 = vld [vmem:[%s1 + $0x3c8] sm:$0xff]
    %v147 = vld [vmem:[%s1 + $0x3d0] sm:$0xff]
    %v148 = vld [vmem:[%s1 + $0x3d8] sm:$0xff]
    %v149 = vld [vmem:[%s1 + $0x3e0] sm:$0xff]
    %v150 = vld [vmem:[%s1 + $0x3e8] sm:$0xff]
    %v151 = vld [vmem:[%s1 + $0x3f0] sm:$0xff]
    %v152 = vld [vmem:[%s1 + $0x3f8] sm:$0xff]
    %v153 = vld [vmem:[%s1 + $0x400] sm:$0xff]
    %v154 = vld [vmem:[%s1 + $0x408] sm:$0xff]
    %v155 = vld [vmem:[%s1 + $0x410] sm:$0xff]
    %v156 = vld [vmem:[%s1 + $0x418] sm:$0xff]
    %v157 = vld [vmem:[%s1 + $0x420] sm:$0xff]
    %v158 = vld [vmem:[%s1 + $0x428] sm:$0xff]
    %v159 = vld [vmem:[%s1 + $0x430] sm:$0xff]
    %v160 = vld [vmem:[%s1 + $0x438] sm:$0xff]
    %v161 = vld [vmem:[%s1 + $0x440] sm:$0xff]
    %v162 = vld [vmem:[%s1 + $0x448] sm:$0xff]
    %v163 = vld [vmem:[%s1 + $0x450] sm:$0xff]
    %v164 = vld [vmem:[%s1 + $0x458] sm:$0xff]
    %v165 = vld [vmem:[%s1 + $0x460] sm:$0xff]
    %v166 = vld [vmem:[%s1 + $0x468] sm:$0xff]
    %v167 = vld [vmem:[%s1 + $0x470] sm:$0xff]
    %v168 = vld [vmem:[%s1 + $0x478] sm:$0xff]
    %v169 = vld [vmem:[%s1 + $0x480] sm:$0xff]
    %v170 = vld [vmem:[%s1 + $0x488] sm:$0xff]
    %v171 = vld [vmem:[%s1 + $0x490] sm:$0xff]
    %v172 = vld [vmem:[%s1 + $0x498] sm:$0xff]
    %v173 = vld [vmem:[%s1 + $0x4a0] sm:$0xff]
    %v174 = vld [vmem:[%s1 + $0x4a8] sm:$0xff]
    %v175 = vld [vmem:[%s1 + $0x4b0] sm:$0xff]
    %v176 = vld [vmem:[%s1 + $0x4b8] sm:$0xff]
    %v177 = vld [vmem:[%s1 + $0x4c0] sm:$0xff]
    %v178 = vld [vmem:[%s1 + $0x4c8] sm:$0xff]
    %v179 = vld [vmem:[%s1 + $0x4d0] sm:$0xff]
    %v180 = vld [vmem:[%s1 + $0x4d8] sm:$0xff]
    %v181 = vld [vmem:[%s1 + $0x4e0] sm:$0xff]
    %v182 = vld [vmem:[%s1 + $0x4e8] sm:$0xff]
    %v183 = vld [vmem:[%s1 + $0x4f0] sm:$0xff]
    %v184 = vld [vmem:[%s1 + $0x4f8] sm:$0xff]
    %v185 = vld [vmem:[%s1 + $0x500] sm:$0xff]
    %v186 = vld [vmem:[%s1 + $0x508] sm:$0xff]
    %v187 = vld [vmem:[%s1 + $0x510] sm:$0xff]
    %v188 = vld [vmem:[%s1 + $0x518] sm:$0xff]
    %v189 = vld [vmem:[%s1 + $0x520] sm:$0xff]
    %v190 = vld [vmem:[%s1 + $0x528] sm:$0xff]
    %v191 = vld [vmem:[%s1 + $0x530] sm:$0xff]
    %v192 = vld [vmem:[%s1 + $0x538] sm:$0xff]
    %v193 = vld [vmem:[%s1 + $0x540] sm:$0xff]
    %v194 = vld [vmem:[%s1 + $0x548] sm:$0xff]
    %v195 = vld [vmem:[%s1 + $0x550] sm:$0xff]
    %v196 = vld [vmem:[%s1 + $0x558] sm:$0xff]
    %v197 = vld [vmem:[%s1 + $0x560] sm:$0xff]
    %v198 = vld [vmem:[%s1 + $0x568] sm:$0xff]
    %v199 = vld [vmem:[%s1 + $0x570] sm:$0xff]
    %v200 = vld [vmem:[%s1 + $0x578] sm:$0xff]
    %v201 = vld [vmem:[%s1 + $0x580] sm:$0xff]
    %v202 = vld [vmem:[%s1 + $0x588] sm:$0xff]
    %v203 = vld [vmem:[%s1 + $0x590] sm:$0xff]
    %v204 = vld [vmem:[%s1 + $0x598] sm:$0xff]
    %v205 = vld [vmem:[%s1 + $0x5a0] sm:$0xff]
    %v206 = vld [vmem:[%s1 + $0x5a8] sm:$0xff]
    %v207 = vld [vmem:[%s1 + $0x5b0] sm:$0xff]
    %v208 = vld [vmem:[%s1 + $0x5b8] sm:$0xff]
    %v209 = vld [vmem:[%s1 + $0x5c0] sm:$0xff]
    %v210 = vld [vmem:[%s1 + $0x5c8] sm:$0xff]
    %v211 = vld [vmem:[%s1 + $0x5d0] sm:$0xff]
    %v212 = vld [vmem:[%s1 + $0x5d8] sm:$0xff]
    %v213 = vld [vmem:[%s1 + $0x5e0] sm:$0xff]
    %v214 = vld [vmem:[%s1 + $0x5e8] sm:$0xff]
    %v215 = vld [vmem:[%s1 + $0x5f0] sm:$0xff]
    %v216 = vld [vmem:[%s1 + $0x5f8] sm:$0xff]
    %v217 = vld [vmem:[%s1 + $0x600] sm:$0xff]
    %v218 = vld [vmem:[%s1 + $0x608] sm:$0xff]
    %v219 = vld [vmem:[%s1 + $0x610] sm:$0xff]
    %v220 = vld [vmem:[%s1 + $0x618] sm:$0xff]
    %v221 = vld [vmem:[%s1 + $0x620] sm:$0xff]
    %v222 = vld [vmem:[%s1 + $0x628] sm:$0xff]
    %v223 = vld [vmem:[%s1 + $0x630] sm:$0xff]
    %v224 = vld [vmem:[%s1 + $0x638] sm:$0xff]
    %v225 = vld [vmem:[%s1 + $0x640] sm:$0xff]
    %v226 = vld [vmem:[%s1 + $0x648] sm:$0xff]
    %v227 = vld [vmem:[%s1 + $0x650] sm:$0xff]
    %v228 = vld [vmem:[%s1 + $0x658] sm:$0xff]
    %v229 = vld [vmem:[%s1 + $0x660] sm:$0xff]
    %v230 = vld [vmem:[%s1 + $0x668] sm:$0xff]
    %v231 = vld [vmem:[%s1 + $0x670] sm:$0xff]
    %v232 = vld [vmem:[%s1 + $0x678] sm:$0xff]
    %v233 = vld [vmem:[%s1 + $0x680] sm:$0xff]
    %v234 = vld [vmem:[%s1 + $0x688] sm:$0xff]
    %v235 = vld [vmem:[%s1 + $0x690] sm:$0xff]
    %v236 = vld [vmem:[%s1 + $0x698] sm:$0xff]
    %v237 = vld [vmem:[%s1 + $0x6a0] sm:$0xff]
    %v238 = vld [vmem:[%s1 + $0x6a8] sm:$0xff]
    %v239 = vld [vmem:[%s1 + $0x6b0] sm:$0xff]
    %v240 = vld [vmem:[%s1 + $0x6b8] sm:$0xff]
    %v241 = vld [vmem:[%s1 + $0x6c0] sm:$0xff]
    %v242 = vld [vmem:[%s1 + $0x6c8] sm:$0xff]
    %v243 = vld [vmem:[%s1 + $0x6d0] sm:$0xff]
    %v244 = vld [vmem:[%s1 + $0x6d8] sm:$0xff]
    %v245 = vld [vmem:[%s1 + $0x6e0] sm:$0xff]
    %v246 = vld [vmem:[%s1 + $0x6e8] sm:$0xff]
    %v247 = vld [vmem:[%s1 + $0x6f0] sm:$0xff]
    %v248 = vld [vmem:[%s1 + $0x6f8] sm:$0xff]
    %v249 = vld [vmem:[%s1 + $0x700] sm:$0xff]
    %v250 = vld [vmem:[%s1 + $0x708] sm:$0xff]
    %v251 = vld [vmem:[%s1 + $0x710] sm:$0xff]
    %v252 = vld [vmem:[%s1 + $0x718] sm:$0xff]
    %v253 = vld [vmem:[%s1 + $0x720] sm:$0xff]
    %v254 = vld [vmem:[%s1 + $0x728] sm:$0xff]
    %v255 = vld [vmem:[%s1 + $0x730] sm:$0xff]
    %v256 = vld [vmem:[%s1 + $0x738] sm:$0xff]
    %v257 = vld [vmem:[%s1 + $0x740] sm:$0xff]
    %v258 = vld [vmem:[%s1 + $0x748] sm:$0xff]
    %v259 = vld [vmem:[%s1 + $0x750] sm:$0xff]
    %v260 = vld [vmem:[%s1 + $0x758] sm:$0xff]
    %v261 = vld [vmem:[%s1 + $0x760] sm:$0xff]
    %v262 = vld [vmem:[%s1 + $0x768] sm:$0xff]
    %v263 = vld [vmem:[%s1 + $0x770] sm:$0xff]
    %v264 = vld [vmem:[%s1 + $0x778] sm:$0xff]
    %v265 = vld [vmem:[%s1 + $0x780] sm:$0xff]
    %v266 = vld [vmem:[%s1 + $0x788] sm:$0xff]
    %v267 = vld [vmem:[%s1 + $0x790] sm:$0xff]
    %v268 = vld [vmem:[%s1 + $0x798] sm:$0xff]
    %v269 = vld [vmem:[%s1 + $0x7a0] sm:$0xff]
    %v270 = vld [vmem:[%s1 + $0x7a8] sm:$0xff]
    %v271 = vld [vmem:[%s1 + $0x7b0] sm:$0xff]
    %v272 = vld [vmem:[%s1 + $0x7b8] sm:$0xff]
    %v273 = vld [vmem:[%s1 + $0x7c0] sm:$0xff]
    %v274 = vld [vmem:[%s1 + $0x7c8] sm:$0xff]
    %v275 = vld [vmem:[%s1 + $0x7d0] sm:$0xff]
    %v276 = vld [vmem:[%s1 + $0x7d8] sm:$0xff]
    %v277 = vld [vmem:[%s1 + $0x7e0] sm:$0xff]
    %v278 = vld [vmem:[%s1 + $0x7e8] sm:$0xff]
    %v279 = vld [vmem:[%s1 + $0x7f0] sm:$0xff]
    %v280 = vld [vmem:[%s1 + $0x7f8] sm:$0xff]
    %v281 = vld [vmem:[%s1 + $0x800] sm:$0xff]
    %v282 = vld [vmem:[%s1 + $0x808] sm:$0xff]
    %v283 = vld [vmem:[%s1 + $0x810] sm:$0xff]
    %v284 = vld [vmem:[%s1 + $0x818] sm:$0xff]
    %v285 = vld [vmem:[%s1 + $0x820] sm:$0xff]
    %v286 = vld [vmem:[%s1 + $0x828] sm:$0xff]
    %v287 = vld [vmem:[%s1 + $0x830] sm:$0xff]
    %v288 = vld [vmem:[%s1 + $0x838] sm:$0xff]
    %v289 = vld [vmem:[%s1 + $0x840] sm:$0xff]
    %v290 = vld [vmem:[%s1 + $0x848] sm:$0xff]
    %v291 = vld [vmem:[%s1 + $0x850] sm:$0xff]
    %v292 = vld [vmem:[%s1 + $0x858] sm:$0xff]
    %v293 = vld [vmem:[%s1 + $0x860] sm:$0xff]
    %v294 = vld [vmem:[%s1 + $0x868] sm:$0xff]
    %v295 = vld [vmem:[%s1 + $0x870] sm:$0xff]
    %v296 = vld [vmem:[%s1 + $0x878] sm:$0xff]
    %v297 = vld [vmem:[%s1 + $0x880] sm:$0xff]
    %v298 = vld [vmem:[%s1 + $0x888] sm:$0xff]
    %v299 = vld [vmem:[%s1 + $0x890] sm:$0xff]
    %v300 = vld [vmem:[%s1 + $0x898] sm:$0xff]
    %v301 = vld [vmem:[%s1 + $0x8a0] sm:$0xff]
    %v302 = vld [vmem:[%s1 + $0x8a8] sm:$0xff]
    %v303 = vld [vmem:[%s1 + $0x8b0] sm:$0xff]
    %v304 = vld [vmem:[%s1 + $0x8b8] sm:$0xff]
    %v305 = vld [vmem:[%s1 + $0x8c0] sm:$0xff]
    %v306 = vld [vmem:[%s1 + $0x8c8] sm:$0xff]
    %v307 = vld [vmem:[%s1 + $0x8d0] sm:$0xff]
    %v308 = vld [vmem:[%s1 + $0x8d8] sm:$0xff]
    %v309 = vld [vmem:[%s1 + $0x8e0] sm:$0xff]
    %v310 = vld [vmem:[%s1 + $0x8e8] sm:$0xff]
    %v311 = vld [vmem:[%s1 + $0x8f0] sm:$0xff]
    %v312 = vld [vmem:[%s1 + $0x8f8] sm:$0xff]
    %v313 = vld [vmem:[%s1 + $0x900] sm:$0xff]
    %v314 = vld [vmem:[%s1 + $0x908] sm:$0xff]
    %v315 = vld [vmem:[%s1 + $0x910] sm:$0xff]
    %v316 = vld [vmem:[%s1 + $0x918] sm:$0xff]
    %v317 = vld [vmem:[%s1 + $0x920] sm:$0xff]
    %v318 = vld [vmem:[%s1 + $0x928] sm:$0xff]
    %v319 = vld [vmem:[%s1 + $0x930] sm:$0xff]
    %v320 = vld [vmem:[%s1 + $0x938] sm:$0xff]
    %v321 = vld [vmem:[%s1 + $0x940] sm:$0xff]
    %v322 = vld [vmem:[%s1 + $0x948] sm:$0xff]
    %v323 = vld [vmem:[%s1 + $0x950] sm:$0xff]
    %v324 = vld [vmem:[%s1 + $0x958] sm:$0xff]
    %v325 = vld [vmem:[%s1 + $0x960] sm:$0xff]
    %v326 = vld [vmem:[%s1 + $0x968] sm:$0xff]
    %v327 = vld [vmem:[%s1 + $0x970] sm:$0xff]
    %v328 = vld [vmem:[%s1 + $0x978] sm:$0xff]
    %v329 = vld [vmem:[%s1 + $0x980] sm:$0xff]
    %v330 = vld [vmem:[%s1 + $0x988] sm:$0xff]
    %v331 = vld [vmem:[%s1 + $0x990] sm:$0xff]
    %v332 = vld [vmem:[%s1 + $0x998] sm:$0xff]
    %v333 = vld [vmem:[%s1 + $0x9a0] sm:$0xff]
    %v334 = vld [vmem:[%s1 + $0x9a8] sm:$0xff]
    %v335 = vld [vmem:[%s1 + $0x9b0] sm:$0xff]
    %v336 = vld [vmem:[%s1 + $0x9b8] sm:$0xff]
    %v337 = vld [vmem:[%s1 + $0x9c0] sm:$0xff]
    %v338 = vld [vmem:[%s1 + $0x9c8] sm:$0xff]
    %v339 = vld [vmem:[%s1 + $0x9d0] sm:$0xff]
    %v340 = vld [vmem:[%s1 + $0x9d8] sm:$0xff]
    %v341 = vld [vmem:[%s1 + $0x9e0] sm:$0xff]
    %v342 = vld [vmem:[%s1 + $0x9e8] sm:$0xff]
    %v343 = vld [vmem:[%s1 + $0x9f0] sm:$0xff]
    %v344 = vld [vmem:[%s1 + $0x9f8] sm:$0xff]
    %v345 = vld [vmem:[%s1 + $0xa00] sm:$0xff]
    %v346 = vld [vmem:[%s1 + $0xa08] sm:$0xff]
    %v347 = vld [vmem:[%s1 + $0xa10] sm:$0xff]
    %v348 = vld [vmem:[%s1 + $0xa18] sm:$0xff]
    %v349 = vld [vmem:[%s1 + $0xa20] sm:$0xff]
    %v350 = vld [vmem:[%s1 + $0xa28] sm:$0xff]
    %v351 = vld [vmem:[%s1 + $0xa30] sm:$0xff]
    %v352 = vld [vmem:[%s1 + $0xa38] sm:$0xff]
    %v353 = vld [vmem:[%s1 + $0xa40] sm:$0xff]
    %v354 = vld [vmem:[%s1 + $0xa48] sm:$0xff]
    %v355 = vld [vmem:[%s1 + $0xa50] sm:$0xff]
    %v356 = vld [vmem:[%s1 + $0xa58] sm:$0xff]
    %v357 = vld [vmem:[%s1 + $0xa60] sm:$0xff]
    %v358 = vld [vmem:[%s1 + $0xa68] sm:$0xff]
    %v359 = vld [vmem:[%s1 + $0xa70] sm:$0xff]
    %v360 = vld [vmem:[%s1 + $0xa78] sm:$0xff]
    %v361 = vld [vmem:[%s1 + $0xa80] sm:$0xff]
    %v362 = vld [vmem:[%s1 + $0xa88] sm:$0xff]
    %v363 = vld [vmem:[%s1 + $0xa90] sm:$0xff]
    %v364 = vld [vmem:[%s1 + $0xa98] sm:$0xff]
    %v365 = vld [vmem:[%s1 + $0xaa0] sm:$0xff]
    %v366 = vld [vmem:[%s1 + $0xaa8] sm:$0xff]
    %v367 = vld [vmem:[%s1 + $0xab0] sm:$0xff]
    %v368 = vld [vmem:[%s1 + $0xab8] sm:$0xff]
    %v369 = vld [vmem:[%s1 + $0xac0] sm:$0xff]
    %v370 = vld [vmem:[%s1 + $0xac8] sm:$0xff]
    %v371 = vld [vmem:[%s1 + $0xad0] sm:$0xff]
    %v372 = vld [vmem:[%s1 + $0xad8] sm:$0xff]
    %v373 = vld [vmem:[%s1 + $0xae0] sm:$0xff]
    %v374 = vld [vmem:[%s1 + $0xae8] sm:$0xff]
    %v375 = vld [vmem:[%s1 + $0xaf0] sm:$0xff]
    %v376 = vld [vmem:[%s1 + $0xaf8] sm:$0xff]
    %v377 = vld [vmem:[%s1 + $0xb00] sm:$0xff]
    %v378 = vld [vmem:[%s1 + $0xb08] sm:$0xff]
    %v379 = vld [vmem:[%s1 + $0xb10] sm:$0xff]
    %v380 = vld [vmem:[%s1 + $0xb18] sm:$0xff]
    %v381 = vld [vmem:[%s1 + $0xb20] sm:$0xff]
    %v382 = vld [vmem:[%s1 + $0xb28] sm:$0xff]
    %v383 = vld [vmem:[%s1 + $0xb30] sm:$0xff]
    %v384 = vld [vmem:[%s1 + $0xb38] sm:$0xff]
    %v385 = vld [vmem:[%s1 + $0xb40] sm:$0xff]
    %v386 = vld [vmem:[%s1 + $0xb48] sm:$0xff]
    %v387 = vld [vmem:[%s1 + $0xb50] sm:$0xff]
    %v388 = vld [vmem:[%s1 + $0xb58] sm:$0xff]
    %v389 = vld [vmem:[%s1 + $0xb60] sm:$0xff]
    %v390 = vld [vmem:[%s1 + $0xb68] sm:$0xff]
    %v391 = vld [vmem:[%s1 + $0xb70] sm:$0xff]
    %v392 = vld [vmem:[%s1 + $0xb78] sm:$0xff]
    %v393 = vld [vmem:[%s1 + $0xb80] sm:$0xff]
    %v394 = vld [vmem:[%s1 + $0xb88] sm:$0xff]
    %v395 = vld [vmem:[%s1 + $0xb90] sm:$0xff]
    %v396 = vld [vmem:[%s1 + $0xb98] sm:$0xff]
    %v397 = vld [vmem:[%s1 + $0xba0] sm:$0xff]
    %v398 = vld [vmem:[%s1 + $0xba8] sm:$0xff]
    %v399 = vld [vmem:[%s1 + $0xbb0] sm:$0xff]
    %v400 = vld [vmem:[%s1 + $0xbb8] sm:$0xff]
    %v401 = vld [vmem:[%s1 + $0xbc0] sm:$0xff]
    %v402 = vld [vmem:[%s1 + $0xbc8] sm:$0xff]
    %v403 = vld [vmem:[%s1 + $0xbd0] sm:$0xff]
    %v404 = vld [vmem:[%s1 + $0xbd8] sm:$0xff]
    %v405 = vld [vmem:[%s1 + $0xbe0] sm:$0xff]
    %v406 = vld [vmem:[%s1 + $0xbe8] sm:$0xff]
    %v407 = vld [vmem:[%s1 + $0xbf0] sm:$0xff]
    %v408 = vld [vmem:[%s1 + $0xbf8] sm:$0xff]
    %v409 = vld [vmem:[%s1 + $0xc00] sm:$0xff]
    %v410 = vld [vmem:[%s1 + $0xc08] sm:$0xff]
    %v411 = vld [vmem:[%s1 + $0xc10] sm:$0xff]
    %v412 = vld [vmem:[%s1 + $0xc18] sm:$0xff]
    %v413 = vld [vmem:[%s1 + $0xc20] sm:$0xff]
    %v414 = vld [vmem:[%s1 + $0xc28] sm:$0xff]
    %v415 = vld [vmem:[%s1 + $0xc30] sm:$0xff]
    %v416 = vld [vmem:[%s1 + $0xc38] sm:$0xff]
    %v417 = vld [vmem:[%s2] sm:$0xf]
    %v419 = vlaneseq
    %v420 = vshrl.u32 %v419, 7
    %v421 = vsub.s32 0, %v420
    %v422 = vrot.slane %v417, %v421
    %v423 = vlaneseq
    %v424 = vshrl.u32 %v423, 7
    %v425 = vsub.s32 1, %v424
    %v426 = vrot.slane %v417, %v425
    %v427 = vlaneseq
    %v428 = vshrl.u32 %v427, 7
    %v429 = vsub.s32 2, %v428
    %v430 = vrot.slane %v417, %v429
    %v431 = vlaneseq
    %v432 = vshrl.u32 %v431, 7
    %v433 = vsub.s32 3, %v432
    %v434 = vrot.slane %v417, %v433
    %vm439 = vcmask 130048
    %v441 = vsel %vm439, %v24, 0
    %443 = vmatprep.subr.mxu0 %v86
    %444 = vmatpush1.msra.mxu0 %v85
    %445 = vmatprep.subr.mxu0 %v82
    %446 = vmatpush1.msra.mxu0 %v81
    %447 = vmatprep.subr.mxu0 %v78
    %448 = vmatpush1.msra.mxu0 %v77
    %449 = vmatprep.subr.mxu0 %v74
    %450 = vmatpush1.msra.mxu0 %v73
    %451 = vmatprep.subr.mxu0 %v70
    %452 = vmatpush1.msra.mxu0 %v69
    %453 = vmatprep.subr.mxu0 %v66
    %454 = vmatpush1.msra.mxu0 %v65
    %455 = vmatprep.subr.mxu0 %v62
    %456 = vmatpush1.msra.mxu0 %v61
    %457 = vmatprep.subr.mxu0 %v58
    %458 = vmatpush1.msra.mxu0 %v57
    %459 = vmatprep.subr.mxu0 %v54
    %460 = vmatpush1.msra.mxu0 %v53
    %461 = vmatprep.subr.mxu0 %v50
    %462 = vmatpush1.msra.mxu0 %v49
    %463 = vmatprep.subr.mxu0 %v46
    %464 = vmatpush1.msra.mxu0 %v45
    %465 = vmatprep.subr.mxu0 %v42
    %466 = vmatpush1.msra.mxu0 %v41
    %467 = vmatprep.subr.mxu0 %v38
    %468 = vmatpush1.msra.mxu0 %v37
    %469 = vmatprep.subr.mxu0 %v34
    %470 = vmatpush1.msra.mxu0 %v33
    %471 = vmatprep.subr.mxu0 %v30
    %472 = vmatpush1.msra.mxu0 %v29
    %473 = vmatprep.subr.mxu0 %v26
    %474 = vmatpush1.msra.mxu0 %v25
    %475 = vmatprep.subr.mxu0 %v150
    %476 = vmatpush2.msra.mxu0 %v149
    %477 = vmatprep.subr.mxu0 %v146
    %478 = vmatpush2.msra.mxu0 %v145
    %479 = vmatprep.subr.mxu0 %v142
    %480 = vmatpush2.msra.mxu0 %v141
    %481 = vmatprep.subr.mxu0 %v138
    %482 = vmatpush2.msra.mxu0 %v137
    %483 = vmatprep.subr.mxu0 %v134
    %484 = vmatpush2.msra.mxu0 %v133
    %485 = vmatprep.subr.mxu0 %v130
    %486 = vmatpush2.msra.mxu0 %v129
    %487 = vmatprep.subr.mxu0 %v126
    %488 = vmatpush2.msra.mxu0 %v125
    %489 = vmatprep.subr.mxu0 %v122
    %490 = vmatpush2.msra.mxu0 %v121
    %491 = vmatprep.subr.mxu0 %v118
    %492 = vmatpush2.msra.mxu0 %v117
    %493 = vmatprep.subr.mxu0 %v114
    %494 = vmatpush2.msra.mxu0 %v113
    %495 = vmatprep.subr.mxu0 %v110
    %496 = vmatpush2.msra.mxu0 %v109
    %497 = vmatprep.subr.mxu0 %v106
    %498 = vmatpush2.msra.mxu0 %v105
    %499 = vmatprep.subr.mxu0 %v102
    %500 = vmatpush2.msra.mxu0 %v101
    %501 = vmatprep.subr.mxu0 %v98
    %502 = vmatpush2.msra.mxu0 %v97
    %503 = vmatprep.subr.mxu0 %v94
    %504 = vmatpush2.msra.mxu0 %v93
    %505 = vmatprep.subr.mxu0 %v90
    %506 = vmatpush2.msra.mxu0 %v89
    %507 = vmatprep.mubr.f32.mxu0 %v19
    %508 = vmatmul.mubr.f32.gmra.mxu0 %v18
    %v509 = vpop.f32.mrf.mxu0
    %v510 = vadd.f32 %v422, %v509
    %v511 = vpop.f32.mrf.mxu0
    %v512 = vadd.f32 %v426, %v511
    %513 = vdwg.mxu0
    %514 = vmatprep.subr.mxu0 %v214
    %515 = vmatpush1.msra.mxu0 %v213
    %516 = vmatprep.subr.mxu0 %v210
    %517 = vmatpush1.msra.mxu0 %v209
    %518 = vmatprep.subr.mxu0 %v206
    %519 = vmatpush1.msra.mxu0 %v205
    %520 = vmatprep.subr.mxu0 %v202
    %521 = vmatpush1.msra.mxu0 %v201
    %522 = vmatprep.subr.mxu0 %v198
    %523 = vmatpush1.msra.mxu0 %v197
    %524 = vmatprep.subr.mxu0 %v194
    %525 = vmatpush1.msra.mxu0 %v193
    %526 = vmatprep.subr.mxu0 %v190
    %527 = vmatpush1.msra.mxu0 %v189
    %528 = vmatprep.subr.mxu0 %v186
    %529 = vmatpush1.msra.mxu0 %v185
    %530 = vmatprep.subr.mxu0 %v182
    %531 = vmatpush1.msra.mxu0 %v181
    %532 = vmatprep.subr.mxu0 %v178
    %533 = vmatpush1.msra.mxu0 %v177
    %534 = vmatprep.subr.mxu0 %v174
    %535 = vmatpush1.msra.mxu0 %v173
    %536 = vmatprep.subr.mxu0 %v170
    %537 = vmatpush1.msra.mxu0 %v169
    %538 = vmatprep.subr.mxu0 %v166
    %539 = vmatpush1.msra.mxu0 %v165
    %540 = vmatprep.subr.mxu0 %v162
    %541 = vmatpush1.msra.mxu0 %v161
    %542 = vmatprep.subr.mxu0 %v158
    %543 = vmatpush1.msra.mxu0 %v157
    %544 = vmatprep.subr.mxu0 %v154
    %545 = vmatpush1.msra.mxu0 %v153
    %546 = vmatprep.subr.mxu0 %v278
    %547 = vmatpush2.msra.mxu0 %v277
    %548 = vmatprep.subr.mxu0 %v274
    %549 = vmatpush2.msra.mxu0 %v273
    %550 = vmatprep.subr.mxu0 %v270
    %551 = vmatpush2.msra.mxu0 %v269
    %552 = vmatprep.subr.mxu0 %v266
    %553 = vmatpush2.msra.mxu0 %v265
    %554 = vmatprep.subr.mxu0 %v262
    %555 = vmatpush2.msra.mxu0 %v261
    %556 = vmatprep.subr.mxu0 %v258
    %557 = vmatpush2.msra.mxu0 %v257
    %558 = vmatprep.subr.mxu0 %v254
    %559 = vmatpush2.msra.mxu0 %v253
    %560 = vmatprep.subr.mxu0 %v250
    %561 = vmatpush2.msra.mxu0 %v249
    %562 = vmatprep.subr.mxu0 %v246
    %563 = vmatpush2.msra.mxu0 %v245
    %564 = vmatprep.subr.mxu0 %v242
    %565 = vmatpush2.msra.mxu0 %v241
    %566 = vmatprep.subr.mxu0 %v238
    %567 = vmatpush2.msra.mxu0 %v237
    %568 = vmatprep.subr.mxu0 %v234
    %569 = vmatpush2.msra.mxu0 %v233
    %570 = vmatprep.subr.mxu0 %v230
    %571 = vmatpush2.msra.mxu0 %v229
    %572 = vmatprep.subr.mxu0 %v226
    %573 = vmatpush2.msra.mxu0 %v225
    %574 = vmatprep.subr.mxu0 %v222
    %575 = vmatpush2.msra.mxu0 %v221
    %576 = vmatprep.subr.mxu0 %v218
    %577 = vmatpush2.msra.mxu0 %v217
    %578 = vmatprep.mubr.f32.mxu0 %v21
    %579 = vmatmul.mubr.f32.gmra.mxu0 %v20
    %v580 = vpop.f32.mrf.mxu0
    %v581 = vadd.f32 %v510, %v580
    %v582 = vpop.f32.mrf.mxu0
    %v583 = vadd.f32 %v512, %v582
    %584 = vdwg.mxu0
    %585 = vmatprep.subr.mxu0 %v342
    %586 = vmatpush1.msra.mxu0 %v341
    %587 = vmatprep.subr.mxu0 %v338
    %588 = vmatpush1.msra.mxu0 %v337
    %589 = vmatprep.subr.mxu0 %v334
    %590 = vmatpush1.msra.mxu0 %v333
    %591 = vmatprep.subr.mxu0 %v330
    %592 = vmatpush1.msra.mxu0 %v329
    %593 = vmatprep.subr.mxu0 %v326
    %594 = vmatpush1.msra.mxu0 %v325
    %595 = vmatprep.subr.mxu0 %v322
    %596 = vmatpush1.msra.mxu0 %v321
    %597 = vmatprep.subr.mxu0 %v318
    %598 = vmatpush1.msra.mxu0 %v317
    %599 = vmatprep.subr.mxu0 %v314
    %600 = vmatpush1.msra.mxu0 %v313
    %601 = vmatprep.subr.mxu0 %v310
    %602 = vmatpush1.msra.mxu0 %v309
    %603 = vmatprep.subr.mxu0 %v306
    %604 = vmatpush1.msra.mxu0 %v305
    %605 = vmatprep.subr.mxu0 %v302
    %606 = vmatpush1.msra.mxu0 %v301
    %607 = vmatprep.subr.mxu0 %v298
    %608 = vmatpush1.msra.mxu0 %v297
    %609 = vmatprep.subr.mxu0 %v294
    %610 = vmatpush1.msra.mxu0 %v293
    %611 = vmatprep.subr.mxu0 %v290
    %612 = vmatpush1.msra.mxu0 %v289
    %613 = vmatprep.subr.mxu0 %v286
    %614 = vmatpush1.msra.mxu0 %v285
    %615 = vmatprep.subr.mxu0 %v282
    %616 = vmatpush1.msra.mxu0 %v281
    %617 = vmatprep.subr.mxu0 %v406
    %618 = vmatpush2.msra.mxu0 %v405
    %619 = vmatprep.subr.mxu0 %v402
    %620 = vmatpush2.msra.mxu0 %v401
    %621 = vmatprep.subr.mxu0 %v398
    %622 = vmatpush2.msra.mxu0 %v397
    %623 = vmatprep.subr.mxu0 %v394
    %624 = vmatpush2.msra.mxu0 %v393
    %625 = vmatprep.subr.mxu0 %v390
    %626 = vmatpush2.msra.mxu0 %v389
    %627 = vmatprep.subr.mxu0 %v386
    %628 = vmatpush2.msra.mxu0 %v385
    %629 = vmatprep.subr.mxu0 %v382
    %630 = vmatpush2.msra.mxu0 %v381
    %631 = vmatprep.subr.mxu0 %v378
    %632 = vmatpush2.msra.mxu0 %v377
    %633 = vmatprep.subr.mxu0 %v374
    %634 = vmatpush2.msra.mxu0 %v373
    %635 = vmatprep.subr.mxu0 %v370
    %636 = vmatpush2.msra.mxu0 %v369
    %637 = vmatprep.subr.mxu0 %v366
    %638 = vmatpush2.msra.mxu0 %v365
    %639 = vmatprep.subr.mxu0 %v362
    %640 = vmatpush2.msra.mxu0 %v361
    %641 = vmatprep.subr.mxu0 %v358
    %642 = vmatpush2.msra.mxu0 %v357
    %643 = vmatprep.subr.mxu0 %v354
    %644 = vmatpush2.msra.mxu0 %v353
    %645 = vmatprep.subr.mxu0 %v350
    %646 = vmatpush2.msra.mxu0 %v349
    %647 = vmatprep.subr.mxu0 %v346
    %648 = vmatpush2.msra.mxu0 %v345
    %649 = vmatprep.mubr.f32.mxu0 %v23
    %650 = vmatmul.mubr.f32.gmra.mxu0 %v22
    %v651 = vpop.f32.mrf.mxu0
    %v652 = vadd.f32 %v581, %v651
    %v653 = vpop.f32.mrf.mxu0
    %v654 = vadd.f32 %v583, %v653
    %655 = vdwg.mxu0
    %656 = vmatprep.subr.mxu0 0.0
    %657 = vmatpush1.msra.mxu0 0.0
    %658 = vmatprep.subr.mxu0 0.0
    %659 = vmatpush1.msra.mxu0 0.0
    %660 = vmatprep.subr.mxu0 0.0
    %661 = vmatpush1.msra.mxu0 0.0
    %662 = vmatprep.subr.mxu0 0.0
    %663 = vmatpush1.msra.mxu0 0.0
    %664 = vmatprep.subr.mxu0 0.0
    %665 = vmatpush1.msra.mxu0 0.0
    %666 = vmatprep.subr.mxu0 0.0
    %667 = vmatpush1.msra.mxu0 0.0
    %668 = vmatprep.subr.mxu0 0.0
    %669 = vmatpush1.msra.mxu0 0.0
    %670 = vmatprep.subr.mxu0 0.0
    %671 = vmatpush1.msra.mxu0 0.0
    %672 = vmatprep.subr.mxu0 0.0
    %673 = vmatpush1.msra.mxu0 0.0
    %674 = vmatprep.subr.mxu0 0.0
    %675 = vmatpush1.msra.mxu0 0.0
    %676 = vmatprep.subr.mxu0 0.0
    %677 = vmatpush1.msra.mxu0 0.0
    %678 = vmatprep.subr.mxu0 0.0
    %679 = vmatpush1.msra.mxu0 0.0
    %680 = vmatprep.subr.mxu0 0.0
    %681 = vmatpush1.msra.mxu0 0.0
    %682 = vmatprep.subr.mxu0 0.0
    %683 = vmatpush1.msra.mxu0 0.0
    %684 = vmatprep.subr.mxu0 %v414
    %685 = vmatpush1.msra.mxu0 %v413
    %686 = vmatprep.subr.mxu0 %v410
    %687 = vmatpush1.msra.mxu0 %v409
    %688 = vmatprep.subr.mxu0 0.0
    %689 = vmatpush2.msra.mxu0 0.0
    %690 = vmatprep.subr.mxu0 0.0
    %691 = vmatpush2.msra.mxu0 0.0
    %692 = vmatprep.subr.mxu0 0.0
    %693 = vmatpush2.msra.mxu0 0.0
    %694 = vmatprep.subr.mxu0 0.0
    %695 = vmatpush2.msra.mxu0 0.0
    %696 = vmatprep.subr.mxu0 0.0
    %697 = vmatpush2.msra.mxu0 0.0
    %698 = vmatprep.subr.mxu0 0.0
    %699 = vmatpush2.msra.mxu0 0.0
    %700 = vmatprep.subr.mxu0 0.0
    %701 = vmatpush2.msra.mxu0 0.0
    %702 = vmatprep.subr.mxu0 0.0
    %703 = vmatpush2.msra.mxu0 0.0
    %704 = vmatprep.subr.mxu0 0.0
    %705 = vmatpush2.msra.mxu0 0.0
    %706 = vmatprep.subr.mxu0 0.0
    %707 = vmatpush2.msra.mxu0 0.0
    %708 = vmatprep.subr.mxu0 0.0
    %709 = vmatpush2.msra.mxu0 0.0
    %710 = vmatprep.subr.mxu0 0.0
    %711 = vmatpush2.msra.mxu0 0.0
    %712 = vmatprep.subr.mxu0 0.0
    %713 = vmatpush2.msra.mxu0 0.0
    %714 = vmatprep.subr.mxu0 0.0
    %715 = vmatpush2.msra.mxu0 0.0
    %716 = vmatprep.subr.mxu0 0.0
    %717 = vmatpush2.msra.mxu0 0.0
    %718 = vmatprep.subr.mxu0 0.0
    %719 = vmatpush2.msra.mxu0 0.0
    %720 = vmatprep.mubr.f32.mxu0 0.0
    %721 = vmatmul.mubr.f32.gmra.mxu0 %v441
    %v722 = vpop.f32.mrf.mxu0
    %v723 = vadd.f32 %v652, %v722
    %v724 = vpop.f32.mrf.mxu0
    %v725 = vadd.f32 %v654, %v724
    %726 = vdwg.mxu0
    %727 = vmatprep.subr.mxu0 %v88
    %728 = vmatpush1.msra.mxu0 %v87
    %729 = vmatprep.subr.mxu0 %v84
    %730 = vmatpush1.msra.mxu0 %v83
    %731 = vmatprep.subr.mxu0 %v80
    %732 = vmatpush1.msra.mxu0 %v79
    %733 = vmatprep.subr.mxu0 %v76
    %734 = vmatpush1.msra.mxu0 %v75
    %735 = vmatprep.subr.mxu0 %v72
    %736 = vmatpush1.msra.mxu0 %v71
    %737 = vmatprep.subr.mxu0 %v68
    %738 = vmatpush1.msra.mxu0 %v67
    %739 = vmatprep.subr.mxu0 %v64
    %740 = vmatpush1.msra.mxu0 %v63
    %741 = vmatprep.subr.mxu0 %v60
    %742 = vmatpush1.msra.mxu0 %v59
    %743 = vmatprep.subr.mxu0 %v56
    %744 = vmatpush1.msra.mxu0 %v55
    %745 = vmatprep.subr.mxu0 %v52
    %746 = vmatpush1.msra.mxu0 %v51
    %747 = vmatprep.subr.mxu0 %v48
    %748 = vmatpush1.msra.mxu0 %v47
    %749 = vmatprep.subr.mxu0 %v44
    %750 = vmatpush1.msra.mxu0 %v43
    %751 = vmatprep.subr.mxu0 %v40
    %752 = vmatpush1.msra.mxu0 %v39
    %753 = vmatprep.subr.mxu0 %v36
    %754 = vmatpush1.msra.mxu0 %v35
    %755 = vmatprep.subr.mxu0 %v32
    %756 = vmatpush1.msra.mxu0 %v31
    %757 = vmatprep.subr.mxu0 %v28
    %758 = vmatpush1.msra.mxu0 %v27
    %759 = vmatprep.subr.mxu0 %v152
    %760 = vmatpush2.msra.mxu0 %v151
    %761 = vmatprep.subr.mxu0 %v148
    %762 = vmatpush2.msra.mxu0 %v147
    %763 = vmatprep.subr.mxu0 %v144
    %764 = vmatpush2.msra.mxu0 %v143
    %765 = vmatprep.subr.mxu0 %v140
    %766 = vmatpush2.msra.mxu0 %v139
    %767 = vmatprep.subr.mxu0 %v136
    %768 = vmatpush2.msra.mxu0 %v135
    %769 = vmatprep.subr.mxu0 %v132
    %770 = vmatpush2.msra.mxu0 %v131
    %771 = vmatprep.subr.mxu0 %v128
    %772 = vmatpush2.msra.mxu0 %v127
    %773 = vmatprep.subr.mxu0 %v124
    %774 = vmatpush2.msra.mxu0 %v123
    %775 = vmatprep.subr.mxu0 %v120
    %776 = vmatpush2.msra.mxu0 %v119
    %777 = vmatprep.subr.mxu0 %v116
    %778 = vmatpush2.msra.mxu0 %v115
    %779 = vmatprep.subr.mxu0 %v112
    %780 = vmatpush2.msra.mxu0 %v111
    %781 = vmatprep.subr.mxu0 %v108
    %782 = vmatpush2.msra.mxu0 %v107
    %783 = vmatprep.subr.mxu0 %v104
    %784 = vmatpush2.msra.mxu0 %v103
    %785 = vmatprep.subr.mxu0 %v100
    %786 = vmatpush2.msra.mxu0 %v99
    %787 = vmatprep.subr.mxu0 %v96
    %788 = vmatpush2.msra.mxu0 %v95
    %789 = vmatprep.subr.mxu0 %v92
    %790 = vmatpush2.msra.mxu0 %v91
    %791 = vmatprep.mubr.f32.mxu0 %v19
    %792 = vmatmul.mubr.f32.gmra.mxu0 %v18
    %v793 = vpop.f32.mrf.mxu0
    %v794 = vadd.f32 %v430, %v793
    %v795 = vpop.f32.mrf.mxu0
    %v796 = vadd.f32 %v434, %v795
    %797 = vdwg.mxu0
    %798 = vmatprep.subr.mxu0 %v216
    %799 = vmatpush1.msra.mxu0 %v215
    %800 = vmatprep.subr.mxu0 %v212
    %801 = vmatpush1.msra.mxu0 %v211
    %802 = vmatprep.subr.mxu0 %v208
    %803 = vmatpush1.msra.mxu0 %v207
    %804 = vmatprep.subr.mxu0 %v204
    %805 = vmatpush1.msra.mxu0 %v203
    %806 = vmatprep.subr.mxu0 %v200
    %807 = vmatpush1.msra.mxu0 %v199
    %808 = vmatprep.subr.mxu0 %v196
    %809 = vmatpush1.msra.mxu0 %v195
    %810 = vmatprep.subr.mxu0 %v192
    %811 = vmatpush1.msra.mxu0 %v191
    %812 = vmatprep.subr.mxu0 %v188
    %813 = vmatpush1.msra.mxu0 %v187
    %814 = vmatprep.subr.mxu0 %v184
    %815 = vmatpush1.msra.mxu0 %v183
    %816 = vmatprep.subr.mxu0 %v180
    %817 = vmatpush1.msra.mxu0 %v179
    %818 = vmatprep.subr.mxu0 %v176
    %819 = vmatpush1.msra.mxu0 %v175
    %820 = vmatprep.subr.mxu0 %v172
    %821 = vmatpush1.msra.mxu0 %v171
    %822 = vmatprep.subr.mxu0 %v168
    %823 = vmatpush1.msra.mxu0 %v167
    %824 = vmatprep.subr.mxu0 %v164
    %825 = vmatpush1.msra.mxu0 %v163
    %826 = vmatprep.subr.mxu0 %v160
    %827 = vmatpush1.msra.mxu0 %v159
    %828 = vmatprep.subr.mxu0 %v156
    %829 = vmatpush1.msra.mxu0 %v155
    %830 = vmatprep.subr.mxu0 %v280
    %831 = vmatpush2.msra.mxu0 %v279
    %832 = vmatprep.subr.mxu0 %v276
    %833 = vmatpush2.msra.mxu0 %v275
    %834 = vmatprep.subr.mxu0 %v272
    %835 = vmatpush2.msra.mxu0 %v271
    %836 = vmatprep.subr.mxu0 %v268
    %837 = vmatpush2.msra.mxu0 %v267
    %838 = vmatprep.subr.mxu0 %v264
    %839 = vmatpush2.msra.mxu0 %v263
    %840 = vmatprep.subr.mxu0 %v260
    %841 = vmatpush2.msra.mxu0 %v259
    %842 = vmatprep.subr.mxu0 %v256
    %843 = vmatpush2.msra.mxu0 %v255
    %844 = vmatprep.subr.mxu0 %v252
    %845 = vmatpush2.msra.mxu0 %v251
    %846 = vmatprep.subr.mxu0 %v248
    %847 = vmatpush2.msra.mxu0 %v247
    %848 = vmatprep.subr.mxu0 %v244
    %849 = vmatpush2.msra.mxu0 %v243
    %850 = vmatprep.subr.mxu0 %v240
    %851 = vmatpush2.msra.mxu0 %v239
    %852 = vmatprep.subr.mxu0 %v236
    %853 = vmatpush2.msra.mxu0 %v235
    %854 = vmatprep.subr.mxu0 %v232
    %855 = vmatpush2.msra.mxu0 %v231
    %856 = vmatprep.subr.mxu0 %v228
    %857 = vmatpush2.msra.mxu0 %v227
    %858 = vmatprep.subr.mxu0 %v224
    %859 = vmatpush2.msra.mxu0 %v223
    %860 = vmatprep.subr.mxu0 %v220
    %861 = vmatpush2.msra.mxu0 %v219
    %862 = vmatprep.mubr.f32.mxu0 %v21
    %863 = vmatmul.mubr.f32.gmra.mxu0 %v20
    %v864 = vpop.f32.mrf.mxu0
    %v865 = vadd.f32 %v794, %v864
    %v866 = vpop.f32.mrf.mxu0
    %v867 = vadd.f32 %v796, %v866
    %868 = vdwg.mxu0
    %869 = vmatprep.subr.mxu0 %v344
    %870 = vmatpush1.msra.mxu0 %v343
    %871 = vmatprep.subr.mxu0 %v340
    %872 = vmatpush1.msra.mxu0 %v339
    %873 = vmatprep.subr.mxu0 %v336
    %874 = vmatpush1.msra.mxu0 %v335
    %875 = vmatprep.subr.mxu0 %v332
    %876 = vmatpush1.msra.mxu0 %v331
    %877 = vmatprep.subr.mxu0 %v328
    %878 = vmatpush1.msra.mxu0 %v327
    %879 = vmatprep.subr.mxu0 %v324
    %880 = vmatpush1.msra.mxu0 %v323
    %881 = vmatprep.subr.mxu0 %v320
    %882 = vmatpush1.msra.mxu0 %v319
    %883 = vmatprep.subr.mxu0 %v316
    %884 = vmatpush1.msra.mxu0 %v315
    %885 = vmatprep.subr.mxu0 %v312
    %886 = vmatpush1.msra.mxu0 %v311
    %887 = vmatprep.subr.mxu0 %v308
    %888 = vmatpush1.msra.mxu0 %v307
    %889 = vmatprep.subr.mxu0 %v304
    %890 = vmatpush1.msra.mxu0 %v303
    %891 = vmatprep.subr.mxu0 %v300
    %892 = vmatpush1.msra.mxu0 %v299
    %893 = vmatprep.subr.mxu0 %v296
    %894 = vmatpush1.msra.mxu0 %v295
    %895 = vmatprep.subr.mxu0 %v292
    %896 = vmatpush1.msra.mxu0 %v291
    %897 = vmatprep.subr.mxu0 %v288
    %898 = vmatpush1.msra.mxu0 %v287
    %899 = vmatprep.subr.mxu0 %v284
    %900 = vmatpush1.msra.mxu0 %v283
    %901 = vmatprep.subr.mxu0 %v408
    %902 = vmatpush2.msra.mxu0 %v407
    %903 = vmatprep.subr.mxu0 %v404
    %904 = vmatpush2.msra.mxu0 %v403
    %905 = vmatprep.subr.mxu0 %v400
    %906 = vmatpush2.msra.mxu0 %v399
    %907 = vmatprep.subr.mxu0 %v396
    %908 = vmatpush2.msra.mxu0 %v395
    %909 = vmatprep.subr.mxu0 %v392
    %910 = vmatpush2.msra.mxu0 %v391
    %911 = vmatprep.subr.mxu0 %v388
    %912 = vmatpush2.msra.mxu0 %v387
    %913 = vmatprep.subr.mxu0 %v384
    %914 = vmatpush2.msra.mxu0 %v383
    %915 = vmatprep.subr.mxu0 %v380
    %916 = vmatpush2.msra.mxu0 %v379
    %917 = vmatprep.subr.mxu0 %v376
    %918 = vmatpush2.msra.mxu0 %v375
    %919 = vmatprep.subr.mxu0 %v372
    %920 = vmatpush2.msra.mxu0 %v371
    %921 = vmatprep.subr.mxu0 %v368
    %922 = vmatpush2.msra.mxu0 %v367
    %923 = vmatprep.subr.mxu0 %v364
    %924 = vmatpush2.msra.mxu0 %v363
    %925 = vmatprep.subr.mxu0 %v360
    %926 = vmatpush2.msra.mxu0 %v359
    %927 = vmatprep.subr.mxu0 %v356
    %928 = vmatpush2.msra.mxu0 %v355
    %929 = vmatprep.subr.mxu0 %v352
    %930 = vmatpush2.msra.mxu0 %v351
    %931 = vmatprep.subr.mxu0 %v348
    %932 = vmatpush2.msra.mxu0 %v347
    %933 = vmatprep.mubr.f32.mxu0 %v23
    %934 = vmatmul.mubr.f32.gmra.mxu0 %v22
    %v935 = vpop.f32.mrf.mxu0
    %v936 = vadd.f32 %v865, %v935
    %v937 = vpop.f32.mrf.mxu0
    %v938 = vadd.f32 %v867, %v937
    %939 = vdwg.mxu0
    %940 = vmatprep.subr.mxu0 0.0
    %941 = vmatpush1.msra.mxu0 0.0
    %942 = vmatprep.subr.mxu0 0.0
    %943 = vmatpush1.msra.mxu0 0.0
    %944 = vmatprep.subr.mxu0 0.0
    %945 = vmatpush1.msra.mxu0 0.0
    %946 = vmatprep.subr.mxu0 0.0
    %947 = vmatpush1.msra.mxu0 0.0
    %948 = vmatprep.subr.mxu0 0.0
    %949 = vmatpush1.msra.mxu0 0.0
    %950 = vmatprep.subr.mxu0 0.0
    %951 = vmatpush1.msra.mxu0 0.0
    %952 = vmatprep.subr.mxu0 0.0
    %953 = vmatpush1.msra.mxu0 0.0
    %954 = vmatprep.subr.mxu0 0.0
    %955 = vmatpush1.msra.mxu0 0.0
    %956 = vmatprep.subr.mxu0 0.0
    %957 = vmatpush1.msra.mxu0 0.0
    %958 = vmatprep.subr.mxu0 0.0
    %959 = vmatpush1.msra.mxu0 0.0
    %960 = vmatprep.subr.mxu0 0.0
    %961 = vmatpush1.msra.mxu0 0.0
    %962 = vmatprep.subr.mxu0 0.0
    %963 = vmatpush1.msra.mxu0 0.0
    %964 = vmatprep.subr.mxu0 0.0
    %965 = vmatpush1.msra.mxu0 0.0
    %966 = vmatprep.subr.mxu0 0.0
    %967 = vmatpush1.msra.mxu0 0.0
    %968 = vmatprep.subr.mxu0 %v416
    %969 = vmatpush1.msra.mxu0 %v415
    %970 = vmatprep.subr.mxu0 %v412
    %971 = vmatpush1.msra.mxu0 %v411
    %972 = vmatprep.subr.mxu0 0.0
    %973 = vmatpush2.msra.mxu0 0.0
    %974 = vmatprep.subr.mxu0 0.0
    %975 = vmatpush2.msra.mxu0 0.0
    %976 = vmatprep.subr.mxu0 0.0
    %977 = vmatpush2.msra.mxu0 0.0
    %978 = vmatprep.subr.mxu0 0.0
    %979 = vmatpush2.msra.mxu0 0.0
    %980 = vmatprep.subr.mxu0 0.0
    %981 = vmatpush2.msra.mxu0 0.0
    %982 = vmatprep.subr.mxu0 0.0
    %983 = vmatpush2.msra.mxu0 0.0
    %984 = vmatprep.subr.mxu0 0.0
    %985 = vmatpush2.msra.mxu0 0.0
    %986 = vmatprep.subr.mxu0 0.0
    %987 = vmatpush2.msra.mxu0 0.0
    %988 = vmatprep.subr.mxu0 0.0
    %989 = vmatpush2.msra.mxu0 0.0
    %990 = vmatprep.subr.mxu0 0.0
    %991 = vmatpush2.msra.mxu0 0.0
    %992 = vmatprep.subr.mxu0 0.0
    %993 = vmatpush2.msra.mxu0 0.0
    %994 = vmatprep.subr.mxu0 0.0
    %995 = vmatpush2.msra.mxu0 0.0
    %996 = vmatprep.subr.mxu0 0.0
    %997 = vmatpush2.msra.mxu0 0.0
    %998 = vmatprep.subr.mxu0 0.0
    %999 = vmatpush2.msra.mxu0 0.0
    %1000 = vmatprep.subr.mxu0 0.0
    %1001 = vmatpush2.msra.mxu0 0.0
    %1002 = vmatprep.subr.mxu0 0.0
    %1003 = vmatpush2.msra.mxu0 0.0
    %1004 = vmatprep.mubr.f32.mxu0 0.0
    %1005 = vmatmul.mubr.f32.gmra.mxu0 %v441
    %v1006 = vpop.f32.mrf.mxu0
    %v1007 = vadd.f32 %v936, %v1006
    %v1008 = vpop.f32.mrf.mxu0
    %v1009 = vadd.f32 %v938, %v1008
    %1010 = vdwg.mxu0
    %v1011 = vld [vmem:[%s3] sm:$0xff]
    %v1012 = vld [vmem:[%s3 + $0x8] sm:$0xff]
    %v1015 = vcombine.high %v1011, %v1011
    %v1016 = vcombine.high %v1012, %v1012
    %vm1019 = vcmask 1043456
    %v1020 = vsel %vm1019, %v1011, -inf
    %v1021 = vrot.slane %v1020, 4
    %v1022 = vmax.f32 %v1020, %v1021
    %v1023 = vrot.slane %v1022, 2
    %v1024 = vmax.f32 %v1022, %v1023
    %v1025 = vrot.slane %v1024, 1
    %v1026 = vmax.f32 %v1024, %v1025
    %v1027 = vsel %vm1019, %v1015, -inf
    %v1028 = vrot.slane %v1027, 4
    %v1029 = vmax.f32 %v1027, %v1028
    %v1030 = vrot.slane %v1029, 2
    %v1031 = vmax.f32 %v1029, %v1030
    %v1032 = vrot.slane %v1031, 1
    %v1033 = vmax.f32 %v1031, %v1032
    %v1034 = vsel %vm1019, %v1012, -inf
    %v1035 = vrot.slane %v1034, 4
    %v1036 = vmax.f32 %v1034, %v1035
    %v1037 = vrot.slane %v1036, 2
    %v1038 = vmax.f32 %v1036, %v1037
    %v1039 = vrot.slane %v1038, 1
    %v1040 = vmax.f32 %v1038, %v1039
    %vm1041 = vcmask 60416
    %v1042 = vsel %vm1041, %v1016, -inf
    %v1043 = vrot.slane %v1042, 4
    %v1044 = vmax.f32 %v1042, %v1043
    %v1045 = vrot.slane %v1044, 2
    %v1046 = vmax.f32 %v1044, %v1045
    %v1047 = vrot.slane %v1046, 1
    %v1048 = vmax.f32 %v1046, %v1047
    %v1053 = vcombine.low %v1026, %v1033
    %v1054 = vcombine.low %v1040, %v1048
    %v1057 = vsub.f32 %v1011, %v1053
    %v1058 = vsub.f32 %v1012, %v1054
    %v1059 = vmul.f32 %v1057, 1.442695
    %v1060 = vpow.pop %v1059
    %v1061 = vmul.f32 %v1058, 1.442695
    %v1062 = vpow.pop %v1061
    %v1065 = vcombine.high %v1060, %v1060
    %v1066 = vcombine.high %v1062, %v1062
    %v1069 = vsel %vm1019, %v1060, 0.0
    %v1070 = vrot.slane %v1069, 4
    %v1071 = vadd.f32 %v1069, %v1070
    %v1072 = vrot.slane %v1071, 2
    %v1073 = vadd.f32 %v1071, %v1072
    %v1074 = vrot.slane %v1073, 1
    %v1075 = vadd.f32 %v1073, %v1074
    %v1076 = vsel %vm1019, %v1065, 0.0
    %v1077 = vrot.slane %v1076, 4
    %v1078 = vadd.f32 %v1076, %v1077
    %v1079 = vrot.slane %v1078, 2
    %v1080 = vadd.f32 %v1078, %v1079
    %v1081 = vrot.slane %v1080, 1
    %v1082 = vadd.f32 %v1080, %v1081
    %v1083 = vsel %vm1019, %v1062, 0.0
    %v1084 = vrot.slane %v1083, 4
    %v1085 = vadd.f32 %v1083, %v1084
    %v1086 = vrot.slane %v1085, 2
    %v1087 = vadd.f32 %v1085, %v1086
    %v1088 = vrot.slane %v1087, 1
    %v1089 = vadd.f32 %v1087, %v1088
    %v1090 = vsel %vm1041, %v1066, 0.0
    %v1091 = vrot.slane %v1090, 4
    %v1092 = vadd.f32 %v1090, %v1091
    %v1093 = vrot.slane %v1092, 2
    %v1094 = vadd.f32 %v1092, %v1093
    %v1095 = vrot.slane %v1094, 1
    %v1096 = vadd.f32 %v1094, %v1095
    %v1101 = vcombine.low %v1075, %v1082
    %v1102 = vcombine.low %v1089, %v1096
    %v1105 = vrcp.pop %v1101
    %v1106 = vmul.f32 %v1060, %v1105
    %v1107 = vrcp.pop %v1102
    %v1108 = vmul.f32 %v1062, %v1107
    %v1109 = vsub.f32 0.0, %v723
    %v1110 = vsub.f32 0.0, %v725
    %v1111 = vsub.f32 0.0, %v1007
    %v1112 = vsub.f32 0.0, %v1009
    %v1113 = vmul.f32 %v1109, 1.442695
    %v1114 = vpow.pop %v1113
    %v1115 = vmul.f32 %v1110, 1.442695
    %v1116 = vpow.pop %v1115
    %v1117 = vmul.f32 %v1111, 1.442695
    %v1118 = vpow.pop %v1117
    %v1119 = vmul.f32 %v1112, 1.442695
    %v1120 = vpow.pop %v1119
    %v1121 = vadd.f32 %v1114, 1.0
    %v1122 = vadd.f32 %v1116, 1.0
    %v1123 = vadd.f32 %v1118, 1.0
    %v1124 = vadd.f32 %v1120, 1.0
    %v1125 = vrcp.pop %v1121
    %v1126 = vmul.f32 1.0, %v1125
    %v1127 = vrcp.pop %v1122
    %v1128 = vmul.f32 1.0, %v1127
    %v1129 = vrcp.pop %v1123
    %v1130 = vmul.f32 1.0, %v1129
    %v1131 = vrcp.pop %v1124
    %v1132 = vmul.f32 1.0, %v1131
    %v1133 = vmax.f32 %v723, 0.0
    %v1134 = vmax.f32 %v725, 0.0
    %v1135 = vmax.f32 %v1007, 0.0
    %v1136 = vmax.f32 %v1009, 0.0
    %v1139 = vlaneseq
    %v1140 = vshrl.u32 %v1139, 7
    %v1141 = vsub.s32 0, %v1140
    %v1142 = vrot.slane %v1106, %v1141
    %v1143 = vlaneseq
    %v1144 = vshrl.u32 %v1143, 7
    %v1145 = vsub.s32 4, %v1144
    %v1146 = vrot.slane %v1106, %v1145
    %v1147 = vlaneseq
    %v1148 = vshrl.u32 %v1147, 7
    %v1149 = vsub.s32 0, %v1148
    %v1150 = vrot.slane %v1108, %v1149
    %v1151 = vlaneseq
    %v1152 = vshrl.u32 %v1151, 7
    %v1153 = vsub.s32 4, %v1152
    %v1154 = vrot.slane %v1108, %v1153
    %v1159 = vlaneseq
    %v1160 = vshrl.u32 %v1159, 7
    %v1161 = vsub.s32 0, %v1160
    %v1162 = vrot.slane %v1142, %v1161
    %v1163 = vlaneseq
    %v1164 = vshrl.u32 %v1163, 7
    %v1165 = vsub.s32 0, %v1164
    %v1166 = vrot.slane %v1146, %v1165
    %v1167 = vlaneseq
    %v1168 = vshrl.u32 %v1167, 7
    %v1169 = vsub.s32 0, %v1168
    %v1170 = vrot.slane %v1150, %v1169
    %v1171 = vlaneseq
    %v1172 = vshrl.u32 %v1171, 7
    %v1173 = vsub.s32 0, %v1172
    %v1174 = vrot.slane %v1154, %v1173
    %v1175 = vmul.f32 %v1162, %v1133
    %v1176 = vmul.f32 %v1166, %v1134
    %v1177 = vmul.f32 %v1170, %v1135
    %v1178 = vmul.f32 %v1174, %v1136
    %v1179 = vlaneseq
    %v1180 = vshrl.u32 %v1179, 7
    %v1181 = vsub.s32 1, %v1180
    %v1182 = vrot.slane %v1106, %v1181
    %v1183 = vlaneseq
    %v1184 = vshrl.u32 %v1183, 7
    %v1185 = vsub.s32 5, %v1184
    %v1186 = vrot.slane %v1106, %v1185
    %v1187 = vlaneseq
    %v1188 = vshrl.u32 %v1187, 7
    %v1189 = vsub.s32 1, %v1188
    %v1190 = vrot.slane %v1108, %v1189
    %v1191 = vlaneseq
    %v1192 = vshrl.u32 %v1191, 7
    %v1193 = vsub.s32 5, %v1192
    %v1194 = vrot.slane %v1108, %v1193
    %v1199 = vlaneseq
    %v1200 = vshrl.u32 %v1199, 7
    %v1201 = vsub.s32 1, %v1200
    %v1202 = vrot.slane %v1182, %v1201
    %v1203 = vlaneseq
    %v1204 = vshrl.u32 %v1203, 7
    %v1205 = vsub.s32 1, %v1204
    %v1206 = vrot.slane %v1186, %v1205
    %v1207 = vlaneseq
    %v1208 = vshrl.u32 %v1207, 7
    %v1209 = vsub.s32 1, %v1208
    %v1210 = vrot.slane %v1190, %v1209
    %v1211 = vlaneseq
    %v1212 = vshrl.u32 %v1211, 7
    %v1213 = vsub.s32 1, %v1212
    %v1214 = vrot.slane %v1194, %v1213
    %v1215 = vmul.f32 %v1202, %v1126
    %v1216 = vmul.f32 %v1206, %v1128
    %v1217 = vmul.f32 %v1210, %v1130
    %v1218 = vmul.f32 %v1214, %v1132
    %v1219 = vadd.f32 %v1175, %v1215
    %v1220 = vadd.f32 %v1176, %v1216
    %v1221 = vadd.f32 %v1177, %v1217
    %v1222 = vadd.f32 %v1178, %v1218
    %v1223 = vtanh.pop %v723
    %v1224 = vtanh.pop %v725
    %v1225 = vtanh.pop %v1007
    %v1226 = vtanh.pop %v1009
    %v1227 = vlaneseq
    %v1228 = vshrl.u32 %v1227, 7
    %v1229 = vsub.s32 2, %v1228
    %v1230 = vrot.slane %v1106, %v1229
    %v1231 = vlaneseq
    %v1232 = vshrl.u32 %v1231, 7
    %v1233 = vsub.s32 6, %v1232
    %v1234 = vrot.slane %v1106, %v1233
    %v1235 = vlaneseq
    %v1236 = vshrl.u32 %v1235, 7
    %v1237 = vsub.s32 2, %v1236
    %v1238 = vrot.slane %v1108, %v1237
    %v1239 = vlaneseq
    %v1240 = vshrl.u32 %v1239, 7
    %v1241 = vsub.s32 6, %v1240
    %v1242 = vrot.slane %v1108, %v1241
    %v1247 = vlaneseq
    %v1248 = vshrl.u32 %v1247, 7
    %v1249 = vsub.s32 2, %v1248
    %v1250 = vrot.slane %v1230, %v1249
    %v1251 = vlaneseq
    %v1252 = vshrl.u32 %v1251, 7
    %v1253 = vsub.s32 2, %v1252
    %v1254 = vrot.slane %v1234, %v1253
    %v1255 = vlaneseq
    %v1256 = vshrl.u32 %v1255, 7
    %v1257 = vsub.s32 2, %v1256
    %v1258 = vrot.slane %v1238, %v1257
    %v1259 = vlaneseq
    %v1260 = vshrl.u32 %v1259, 7
    %v1261 = vsub.s32 2, %v1260
    %v1262 = vrot.slane %v1242, %v1261
    %v1263 = vmul.f32 %v1250, %v1223
    %v1264 = vmul.f32 %v1254, %v1224
    %v1265 = vmul.f32 %v1258, %v1225
    %v1266 = vmul.f32 %v1262, %v1226
    %v1267 = vadd.f32 %v1219, %v1263
    %v1268 = vadd.f32 %v1220, %v1264
    %v1269 = vadd.f32 %v1221, %v1265
    %v1270 = vadd.f32 %v1222, %v1266
    %v1271 = vlaneseq
    %v1272 = vshrl.u32 %v1271, 7
    %v1273 = vsub.s32 3, %v1272
    %v1274 = vrot.slane %v1106, %v1273
    %v1275 = vlaneseq
    %v1276 = vshrl.u32 %v1275, 7
    %v1277 = vsub.s32 7, %v1276
    %v1278 = vrot.slane %v1106, %v1277
    %v1279 = vlaneseq
    %v1280 = vshrl.u32 %v1279, 7
    %v1281 = vsub.s32 3, %v1280
    %v1282 = vrot.slane %v1108, %v1281
    %v1283 = vlaneseq
    %v1284 = vshrl.u32 %v1283, 7
    %v1285 = vsub.s32 7, %v1284
    %v1286 = vrot.slane %v1108, %v1285
    %v1291 = vlaneseq
    %v1292 = vshrl.u32 %v1291, 7
    %v1293 = vsub.s32 3, %v1292
    %v1294 = vrot.slane %v1274, %v1293
    %v1295 = vlaneseq
    %v1296 = vshrl.u32 %v1295, 7
    %v1297 = vsub.s32 3, %v1296
    %v1298 = vrot.slane %v1278, %v1297
    %v1299 = vlaneseq
    %v1300 = vshrl.u32 %v1299, 7
    %v1301 = vsub.s32 3, %v1300
    %v1302 = vrot.slane %v1282, %v1301
    %v1303 = vlaneseq
    %v1304 = vshrl.u32 %v1303, 7
    %v1305 = vsub.s32 3, %v1304
    %v1306 = vrot.slane %v1286, %v1305
    %v1307 = vmul.f32 %v1294, %v723
    %v1308 = vmul.f32 %v1298, %v725
    %v1309 = vmul.f32 %v1302, %v1007
    %v1310 = vmul.f32 %v1306, %v1009
    %v1311 = vadd.f32 %v1267, %v1307
    %v1312 = vadd.f32 %v1268, %v1308
    %v1313 = vadd.f32 %v1269, %v1309
    %v1314 = vadd.f32 %v1270, %v1310
    %1315 = vst [vmem:[#allocation2] sm:$0xff] %v1311
    %1316 = vst [vmem:[#allocation2 + $0x8] sm:$0xff] %v1312
    %1317 = vst [vmem:[#allocation2 + $0x10] sm:$0xff] %v1313
    %vm1318 = vcmask 64512
    %1319 = vst.msk [vmem:[#allocation2 + $0x18] sm:$0xff] %vm1318, %v1314
    // Predicated region
    $region18: #{tpu_custom_call.1} parent=1 // pred_check
      _
    $region19: #{tpu_custom_call.1} parent=1 // pred_check_branch
      %1321 = sbr.rel (0) target = $region21
    $region20: #{tpu_custom_call.1} parent=1 // pred_region
      %s1323 = ssub.s32 512, 512
      %1324 = vsyncadd [#allocation3], %s1323
      %s1326 = sshll.u32 [#allocation2], 4
      %s1327 = int_to_ptr.vmem [resolvable:$true] %s1326
      %1329 = dma.vmem_to_hbm [thread:$0]  %s1327, 512, %s4, [#allocation3]
    $region21: #{tpu_custom_call.1} parent=1 // pred_fallthru
      _
    // Predicated region
    $region22: #{tpu_custom_call.1} parent=1 // pred_check
      _
    $region23: #{tpu_custom_call.1} parent=1 // pred_check_branch
      %1331 = sbr.rel (0) target = $region25
    $region24: #{tpu_custom_call.1} parent=1 // pred_region
      %1332 = dma.done [#allocation3], 512
    $region25: #{tpu_custom_call.1} parent=1 // pred_fallthru
      _
    %1333 = vsyncpa [#allocation3], 1

</llo_original>
